<compile_context>
chip_gen: v6e
topology: v6e:2x2x1
jax: 0.10.0
libtpu: 0.0.40
codegen_flags: <defaults>
</compile_context>

<pallas_src>
import jax
import jax.numpy as jnp
from jax.experimental import pallas as pl
from jax.experimental.pallas import tpu as pltpu

LANE = 128
SUBLANE = 8


def _round_up(x, m):
    return ((x + m - 1) // m) * m


def _net_kernel(x_ref, w1_ref, w2_ref, out_ref):
    # x_ref:(TB, S+1)  w1_ref:(S+1, Hp)  w2_ref:(Hp, Ap)  out_ref:(TB, Ap)
    # Biases are already folded into w1/w2 (ones column in x, carrier row/col).
    h = jnp.dot(x_ref[...], w1_ref[...], preferred_element_type=jnp.float32)
    h = jnp.maximum(h, 0.0)                       # carrier column stays == 1
    y = jnp.dot(h.astype(w2_ref.dtype), w2_ref[...],
                preferred_element_type=jnp.float32)
    out_ref[...] = y.astype(out_ref.dtype)


def net_forward(x, w1, b1, w2, b2, *, block_b=256, compute_dtype=jnp.float32):
    """Forward of the DQN Net: relu(x @ w1 + b1) @ w2 + b2.

    x:(B,S) float; w1:(S,H); b1:(H,) or (1,H); w2:(H,A); b2:(A,) or (1,A).
    Weights are stored transposed vs PyTorch (so the kernel computes x @ W).
    """
    B, S = x.shape
    H = w1.shape[1]
    A = w2.shape[1]
    b1 = jnp.reshape(b1, (H,))
    b2 = jnp.reshape(b2, (A,))

    Hp = _round_up(H + 1, LANE)   # lane-dense hidden (+1 slot for bias carrier)
    Ap = _round_up(A, LANE)       # lane-dense output

    # --- Fold biases into lane-padded augmented weights (done once, in XLA) ---
    # W1_aug: rows 0..S-1 = w1, row S = b1; W1_aug[S, Hp-1] = 1 -> carrier unit.
    w1a = jnp.zeros((S + 1, Hp), compute_dtype)
    w1a = w1a.at[:S, :H].set(w1.astype(compute_dtype))
    w1a = w1a.at[S, :H].set(b1.astype(compute_dtype))
    w1a = w1a.at[S, Hp - 1].set(jnp.asarray(1.0, compute_dtype))
    # W2_aug: rows 0..H-1 = w2, row Hp-1 = b2 (picked up by the carrier unit).
    w2a = jnp.zeros((Hp, Ap), compute_dtype)
    w2a = w2a.at[:H, :A].set(w2.astype(compute_dtype))
    w2a = w2a.at[Hp - 1, :A].set(b2.astype(compute_dtype))

    # --- Augment x with the ones column, pad the batch to a tile multiple ---
    x_aug = jnp.concatenate(
        [x.astype(compute_dtype), jnp.ones((B, 1), compute_dtype)], axis=1)
    tb = block_b if B >= block_b else _round_up(B, SUBLANE)
    Bp = _round_up(B, tb)
    if Bp != B:
        x_aug = jnp.pad(x_aug, ((0, Bp - B), (0, 0)))

    out = pl.pallas_call(
        _net_kernel,
        out_shape=jax.ShapeDtypeStruct((Bp, Ap), jnp.float32),
        grid=(Bp // tb,),
        in_specs=[
            pl.BlockSpec((tb, S + 1), lambda i: (i, 0)),   # x tile, pipelined
            pl.BlockSpec((S + 1, Hp), lambda i: (0, 0)),   # W1_aug, VMEM-resident
            pl.BlockSpec((Hp, Ap), lambda i: (0, 0)),      # W2_aug, VMEM-resident
        ],
        out_specs=pl.BlockSpec((tb, Ap), lambda i: (i, 0)),
        compiler_params=pltpu.CompilerParams(
            dimension_semantics=("parallel",)),            # megacore on v7x
    )(x_aug, w1a, w2a)

    return out[:B, :A]


def init_params(key, n_states, n_actions, hidden=50):
    """Mimics the PyTorch module: weights ~ Normal(0, 0.1); biases use the
    nn.Linear default Uniform(-1/sqrt(fan_in), 1/sqrt(fan_in))."""
    k1, k2, k3, k4 = jax.random.split(key, 4)
    w1 = (0.1 * jax.random.normal(k1, (n_states, hidden))).astype(jnp.float32)
    w2 = (0.1 * jax.random.normal(k2, (hidden, n_actions))).astype(jnp.float32)
    b1 = jax.random.uniform(k3, (hidden,), minval=-1.0 / jnp.sqrt(n_states),
                            maxval=1.0 / jnp.sqrt(n_states)).astype(jnp.float32)
    b2 = jax.random.uniform(k4, (n_actions,), minval=-1.0 / jnp.sqrt(hidden),
                            maxval=1.0 / jnp.sqrt(hidden)).astype(jnp.float32)
    return w1, b1, w2, b2


if __name__ == "__main__":
    key = jax.random.PRNGKey(0)
    k_x, k_p, k_x2 = jax.random.split(key, 3)

    N_STATES, N_ACTIONS, HIDDEN = 4, 3, 50
    w1, b1, w2, b2 = init_params(k_p, N_STATES, N_ACTIONS, HIDDEN)

    def ref_fn(x):
        return jnp.maximum(x @ w1 + b1, 0.0) @ w2 + b2

    # Small (act-path sized) batch, f32.
    x_small = jax.random.normal(k_x, (8, N_STATES), dtype=jnp.float32)
    out_small = jax.block_until_ready(net_forward(x_small, w1, b1, w2, b2))
    assert out_small.shape == (8, N_ACTIONS)
    assert jnp.allclose(out_small, ref_fn(x_small), atol=1e-5, rtol=1e-5)

    # Replay-batch sized: exercises the multi-tile batch grid + batch padding.
    x_big = jax.random.normal(k_x2, (300, N_STATES), dtype=jnp.float32)
    out_big = jax.block_until_ready(
        net_forward(x_big, w1, b1, w2, b2, block_b=256))
    assert out_big.shape == (300, N_ACTIONS)
    assert jnp.allclose(out_big, ref_fn(x_big), atol=1e-5, rtol=1e-5)

    # bf16 inputs/weights (v6e/v7x MXU-native), f32 accumulation.
    out_bf16 = jax.block_until_ready(
        net_forward(x_big, w1, b1, w2, b2, block_b=256,
                    compute_dtype=jnp.bfloat16))
    assert jnp.allclose(out_bf16, ref_fn(x_big), atol=5e-2, rtol=5e-2)

    print("KERNEL_OK")
</pallas_src>

<mosaic_0001>
module attributes {stable_mosaic.version = 11 : i64} {
  func.func @_net_kernel(%arg0: i32, %arg1: memref<8x5xf32, #tpu.memory_space<vmem>>, %arg2: memref<5x128xf32, #tpu.memory_space<vmem>>, %arg3: memref<128x128xf32, #tpu.memory_space<vmem>>, %arg4: memref<8x128xf32, #tpu.memory_space<vmem>>) attributes {dimension_semantics = [#tpu.dimension_semantics<parallel>], iteration_bounds = array<i64: 1>, scalar_prefetch = 0 : i64, scratch_operands = 0 : i64, tpu.core_type = #tpu.core_type<tc>, window_params = [{transform_indices = @transform_0, window_bounds = array<i64: 8, 5>}, {pipeline_mode = #tpu.pipeline_mode<synchronous>, transform_indices = @transform_1, window_bounds = array<i64: 5, 128>}, {pipeline_mode = #tpu.pipeline_mode<synchronous>, transform_indices = @transform_2, window_bounds = array<i64: 128, 128>}, {transform_indices = @transform_3, window_bounds = array<i64: 8, 128>}]} {
    %c0 = arith.constant 0 : index
    %c0_0 = arith.constant 0 : index
    %0 = vector.load %arg1[%c0, %c0_0] : memref<8x5xf32, #tpu.memory_space<vmem>>, vector<8x5xf32>
    %c0_1 = arith.constant 0 : index
    %c0_2 = arith.constant 0 : index
    %1 = vector.load %arg2[%c0_1, %c0_2] : memref<5x128xf32, #tpu.memory_space<vmem>>, vector<5x128xf32>
    %cst = arith.constant dense<0.000000e+00> : vector<8x128xf32>
    %2 = tpu.matmul %0, %1, %cst {dimension_numbers = #tpu.dot_dimension_numbers<[1], [0], [0], [1], [0, 0, 1, 1], [], []>} : vector<8x5xf32>, vector<5x128xf32>, vector<8x128xf32> -> vector<8x128xf32>
    %cst_3 = arith.constant 0.000000e+00 : f32
    %3 = vector.broadcast %cst_3 : f32 to vector<8x128xf32>
    %4 = arith.maximumf %2, %3 : vector<8x128xf32>
    %c0_4 = arith.constant 0 : index
    %c0_5 = arith.constant 0 : index
    %5 = vector.load %arg3[%c0_4, %c0_5] : memref<128x128xf32, #tpu.memory_space<vmem>>, vector<128x128xf32>
    %cst_6 = arith.constant dense<0.000000e+00> : vector<8x128xf32>
    %6 = tpu.matmul %4, %5, %cst_6 {dimension_numbers = #tpu.dot_dimension_numbers<[1], [0], [0], [1], [0, 0, 1, 1], [], []>} : vector<8x128xf32>, vector<128x128xf32>, vector<8x128xf32> -> vector<8x128xf32>
    %c0_7 = arith.constant 0 : index
    %c0_8 = arith.constant 0 : index
    %7 = vector.load %arg4[%c0_7, %c0_8] : memref<8x128xf32, #tpu.memory_space<vmem>>, vector<8x128xf32>
    tpu.vector_store %arg4[%c0_7, %c0_8], %6 {strides = array<i32>} : memref<8x128xf32, #tpu.memory_space<vmem>>, vector<8x128xf32>,
    return
  }
  func.func @transform_0(%arg0: i32) -> (i32, i32) {
    %c0_i32 = arith.constant 0 : i32
    %c0_i32_0 = arith.constant 0 : i32
    return %arg0, %c0_i32 : i32, i32
  }
  func.func @transform_1(%arg0: i32) -> (i32, i32) {
    %c0_i32 = arith.constant 0 : i32
    %c0_i32_0 = arith.constant 0 : i32
    %c0_i32_1 = arith.constant 0 : i32
    return %c0_i32, %c0_i32_0 : i32, i32
  }
  func.func @transform_2(%arg0: i32) -> (i32, i32) {
    %c0_i32 = arith.constant 0 : i32
    %c0_i32_0 = arith.constant 0 : i32
    %c0_i32_1 = arith.constant 0 : i32
    return %c0_i32, %c0_i32_0 : i32, i32
  }
  func.func @transform_3(%arg0: i32) -> (i32, i32) {
    %c0_i32 = arith.constant 0 : i32
    %c0_i32_0 = arith.constant 0 : i32
    return %arg0, %c0_i32 : i32, i32
  }
}

</mosaic_0001>

<llo_original>
// kernel: tpu_custom_call.1
$region0: #{tpu_custom_call.1}
  #allocation0 [shape = 'u32[]', space=smem, size = 0x4, offset = 0x4, fixed_abs, tag = 'smem constant byte address 0x4 - core index']
  #allocation1 [shape = 'u32[144,128]{1,0:T(1,128)}', space=vmem, size = 0x12000, scoped, tag = 'internal scratch']
  %s0 = inlined_call_operand.hbm [shape: f32[8,5], index: 0, kind: input, shape index: {}]
  %s1 = inlined_call_operand.hbm [shape: f32[5,128], index: 1, kind: input, shape index: {}]
  %s2 = inlined_call_operand.hbm [shape: f32[128,128], index: 2, kind: input, shape index: {}]
  %s3 = inlined_call_operand.hbm [shape: f32[8,128], index: 3, kind: output, shape index: {}]
  %s4 = sld [smem:[#allocation0]]
  $region34: #{tpu_custom_call.1} parent=0
    _
  %s6 = ssub.s32 1, %s4
  %s7 = scalar_select 0, %s6, %s4
  $region1: #{tpu_custom_call.1} parent=0
    #allocation2 [shape = 'u8[4096]{0}', space=vmem, size = 0x1000, scoped, tag = 'input window, operand 0, single buffered']
    #allocation3 [shape = 's32[1]{0}', space=sflag, size = 0x4, scoped, tag = 'scoped memory for tpu_custom_call.1']
    #allocation4 [shape = 's32[1]{0}', space=sflag, size = 0x4, scoped, tag = 'scoped memory for tpu_custom_call.1']
    #allocation5 [shape = 'u8[4096]{0}', space=vmem, size = 0x1000, scoped, tag = 'input window, operand 1, single buffered']
    #allocation6 [shape = 's32[1]{0}', space=sflag, size = 0x4, scoped, tag = 'scoped memory for tpu_custom_call.1']
    #allocation7 [shape = 'u8[65536]{0}', space=vmem, size = 0x10000, scoped, tag = 'input window, operand 2, single buffered']
    #allocation8 [shape = 'u8[4096]{0}', space=vmem, size = 0x1000, scoped, tag = 'output window, operand 0, single buffered']
    %8 = vsyncpa [#allocation3], 0
    %9 = vsyncpa [#allocation6], 0
    %10 = vsyncpa [#allocation4], 0
    // Predicated region
    $region2: #{tpu_custom_call.1} parent=1 // pred_check
      _
    $region3: #{tpu_custom_call.1} parent=1 // pred_check_branch
      %12 = sbr.rel (0) target = $region5
    $region4: #{tpu_custom_call.1} parent=1 // pred_region
      %s14 = ssub.s32 128, 128
      %15 = vsyncadd [#allocation3], %s14
      %s17 = sshll.u32 [#allocation2], 4
      %s18 = int_to_ptr.vmem [resolvable:$true] %s17
      %20 = dma.hbm_to_vmem [thread:$0]  %s0, 128, %s18, [#allocation3]
    $region5: #{tpu_custom_call.1} parent=1 // pred_fallthru
      _
    // Predicated region
    $region6: #{tpu_custom_call.1} parent=1 // pred_check
      _
    $region7: #{tpu_custom_call.1} parent=1 // pred_check_branch
      %22 = sbr.rel (0) target = $region9
    $region8: #{tpu_custom_call.1} parent=1 // pred_region
      %s24 = ssub.s32 128, 128
      %25 = vsyncadd [#allocation6], %s24
      %s27 = sshll.u32 [#allocation5], 4
      %s28 = int_to_ptr.vmem [resolvable:$true] %s27
      %30 = dma.hbm_to_vmem [thread:$0]  %s1, 128, %s28, [#allocation6]
    $region9: #{tpu_custom_call.1} parent=1 // pred_fallthru
      _
    // Predicated region
    $region10: #{tpu_custom_call.1} parent=1 // pred_check
      _
    $region11: #{tpu_custom_call.1} parent=1 // pred_check_branch
      %32 = sbr.rel (0) target = $region13
    $region12: #{tpu_custom_call.1} parent=1 // pred_region
      %s34 = ssub.s32 2048, 2048
      %35 = vsyncadd [#allocation6], %s34
      %s36 = sshll.u32 [#allocation7], 4
      %s37 = int_to_ptr.vmem [resolvable:$true] %s36
      %42 = dma.hbm_to_vmem [thread:$0]  %s2, 2048, %s37, [#allocation6], 128, 128, 8
    $region13: #{tpu_custom_call.1} parent=1 // pred_fallthru
      _
    // Predicated region
    $region14: #{tpu_custom_call.1} parent=1 // pred_check
      _
    $region15: #{tpu_custom_call.1} parent=1 // pred_check_branch
      %44 = sbr.rel (0) target = $region17
    $region16: #{tpu_custom_call.1} parent=1 // pred_region
      %45 = dma.done [#allocation3], 128
    $region17: #{tpu_custom_call.1} parent=1 // pred_fallthru
      _
    // Predicated region
    $region18: #{tpu_custom_call.1} parent=1 // pred_check
      _
    $region19: #{tpu_custom_call.1} parent=1 // pred_check_branch
      %47 = sbr.rel (0) target = $region21
    $region20: #{tpu_custom_call.1} parent=1 // pred_region
      %48 = dma.done [#allocation6], 128
    $region21: #{tpu_custom_call.1} parent=1 // pred_fallthru
      _
    // Predicated region
    $region22: #{tpu_custom_call.1} parent=1 // pred_check
      _
    $region23: #{tpu_custom_call.1} parent=1 // pred_check_branch
      %50 = sbr.rel (0) target = $region25
    $region24: #{tpu_custom_call.1} parent=1 // pred_region
      %51 = dma.done [#allocation6], 2048
    $region25: #{tpu_custom_call.1} parent=1 // pred_fallthru
      _
    %v52 = vld [vmem:[#allocation2] sm:$0xff]
    %v53 = vld [vmem:[#allocation5] sm:$0x1f]
    %vm54 = vcmask 39936
    %v56 = vsel %vm54, %v52, 0
    %vm58 = vcmask 1044480
    %v60 = vsel %vm58, %v53, 0
    %62 = vmatprep.subr.mxu0 0.0
    %63 = vmatpush1.msra.mxu0 0.0
    %64 = vmatprep.subr.mxu0 0.0
    %65 = vmatpush1.msra.mxu0 0.0
    %66 = vmatprep.subr.mxu0 0.0
    %67 = vmatpush1.msra.mxu0 0.0
    %68 = vmatprep.subr.mxu0 0.0
    %69 = vmatpush1.msra.mxu0 0.0
    %70 = vmatprep.subr.mxu0 0.0
    %71 = vmatpush1.msra.mxu0 0.0
    %72 = vmatprep.subr.mxu0 0.0
    %73 = vmatpush1.msra.mxu0 0.0
    %74 = vmatprep.subr.mxu0 0.0
    %75 = vmatpush1.msra.mxu0 0.0
    %76 = vmatprep.subr.mxu0 0.0
    %77 = vmatpush1.msra.mxu0 0.0
    %78 = vmatprep.subr.mxu0 0.0
    %79 = vmatpush1.msra.mxu0 0.0
    %80 = vmatprep.subr.mxu0 0.0
    %81 = vmatpush1.msra.mxu0 0.0
    %82 = vmatprep.subr.mxu0 0.0
    %83 = vmatpush1.msra.mxu0 0.0
    %84 = vmatprep.subr.mxu0 0.0
    %85 = vmatpush1.msra.mxu0 0.0
    %86 = vmatprep.subr.mxu0 0.0
    %87 = vmatpush1.msra.mxu0 0.0
    %88 = vmatprep.subr.mxu0 0.0
    %89 = vmatpush1.msra.mxu0 0.0
    %90 = vmatprep.subr.mxu0 0.0
    %91 = vmatpush1.msra.mxu0 0.0
    %92 = vmatprep.subr.mxu0 0.0
    %93 = vmatpush1.msra.mxu0 %v60
    %94 = vmatprep.subr.mxu0 0.0
    %95 = vmatpush2.msra.mxu0 0.0
    %96 = vmatprep.subr.mxu0 0.0
    %97 = vmatpush2.msra.mxu0 0.0
    %98 = vmatprep.subr.mxu0 0.0
    %99 = vmatpush2.msra.mxu0 0.0
    %100 = vmatprep.subr.mxu0 0.0
    %101 = vmatpush2.msra.mxu0 0.0
    %102 = vmatprep.subr.mxu0 0.0
    %103 = vmatpush2.msra.mxu0 0.0
    %104 = vmatprep.subr.mxu0 0.0
    %105 = vmatpush2.msra.mxu0 0.0
    %106 = vmatprep.subr.mxu0 0.0
    %107 = vmatpush2.msra.mxu0 0.0
    %108 = vmatprep.subr.mxu0 0.0
    %109 = vmatpush2.msra.mxu0 0.0
    %110 = vmatprep.subr.mxu0 0.0
    %111 = vmatpush2.msra.mxu0 0.0
    %112 = vmatprep.subr.mxu0 0.0
    %113 = vmatpush2.msra.mxu0 0.0
    %114 = vmatprep.subr.mxu0 0.0
    %115 = vmatpush2.msra.mxu0 0.0
    %116 = vmatprep.subr.mxu0 0.0
    %117 = vmatpush2.msra.mxu0 0.0
    %118 = vmatprep.subr.mxu0 0.0
    %119 = vmatpush2.msra.mxu0 0.0
    %120 = vmatprep.subr.mxu0 0.0
    %121 = vmatpush2.msra.mxu0 0.0
    %122 = vmatprep.subr.mxu0 0.0
    %123 = vmatpush2.msra.mxu0 0.0
    %124 = vmatprep.subr.mxu0 0.0
    %125 = vmatpush2.msra.mxu0 0.0
    %126 = vmatprep.mubr.f32.mxu0 0.0
    %127 = vmatmul.mubr.f32.gmra.mxu0 %v56
    %v128 = vpop.f32.mrf.mxu0
    %v129 = vadd.f32 0.0, %v128
    %v130 = vpop.f32.mrf.mxu0
    %131 = vdwg.mxu0
    %v132 = vmax.f32 %v129, 0.0
    %v133 = vld [vmem:[#allocation7] sm:$0xff]
    %v134 = vld [vmem:[#allocation7 + $0x8] sm:$0xff]
    %v135 = vld [vmem:[#allocation7 + $0x10] sm:$0xff]
    %v136 = vld [vmem:[#allocation7 + $0x18] sm:$0xff]
    %v137 = vld [vmem:[#allocation7 + $0x20] sm:$0xff]
    %v138 = vld [vmem:[#allocation7 + $0x28] sm:$0xff]
    %v139 = vld [vmem:[#allocation7 + $0x30] sm:$0xff]
    %v140 = vld [vmem:[#allocation7 + $0x38] sm:$0xff]
    %v141 = vld [vmem:[#allocation7 + $0x40] sm:$0xff]
    %v142 = vld [vmem:[#allocation7 + $0x48] sm:$0xff]
    %v143 = vld [vmem:[#allocation7 + $0x50] sm:$0xff]
    %v144 = vld [vmem:[#allocation7 + $0x58] sm:$0xff]
    %v145 = vld [vmem:[#allocation7 + $0x60] sm:$0xff]
    %v146 = vld [vmem:[#allocation7 + $0x68] sm:$0xff]
    %v147 = vld [vmem:[#allocation7 + $0x70] sm:$0xff]
    %v148 = vld [vmem:[#allocation7 + $0x78] sm:$0xff]
    %149 = vmatprep.subr.mxu0 0.0
    %150 = vmatpush1.msra.mxu0 %v148
    %151 = vmatprep.subr.mxu0 0.0
    %152 = vmatpush1.msra.mxu0 %v147
    %153 = vmatprep.subr.mxu0 0.0
    %154 = vmatpush1.msra.mxu0 %v146
    %155 = vmatprep.subr.mxu0 0.0
    %156 = vmatpush1.msra.mxu0 %v145
    %157 = vmatprep.subr.mxu0 0.0
    %158 = vmatpush1.msra.mxu0 %v144
    %159 = vmatprep.subr.mxu0 0.0
    %160 = vmatpush1.msra.mxu0 %v143
    %161 = vmatprep.subr.mxu0 0.0
    %162 = vmatpush1.msra.mxu0 %v142
    %163 = vmatprep.subr.mxu0 0.0
    %164 = vmatpush1.msra.mxu0 %v141
    %165 = vmatprep.subr.mxu0 0.0
    %166 = vmatpush1.msra.mxu0 %v140
    %167 = vmatprep.subr.mxu0 0.0
    %168 = vmatpush1.msra.mxu0 %v139
    %169 = vmatprep.subr.mxu0 0.0
    %170 = vmatpush1.msra.mxu0 %v138
    %171 = vmatprep.subr.mxu0 0.0
    %172 = vmatpush1.msra.mxu0 %v137
    %173 = vmatprep.subr.mxu0 0.0
    %174 = vmatpush1.msra.mxu0 %v136
    %175 = vmatprep.subr.mxu0 0.0
    %176 = vmatpush1.msra.mxu0 %v135
    %177 = vmatprep.subr.mxu0 0.0
    %178 = vmatpush1.msra.mxu0 %v134
    %179 = vmatprep.subr.mxu0 0.0
    %180 = vmatpush1.msra.mxu0 %v133
    %181 = vmatprep.subr.mxu0 0.0
    %182 = vmatpush2.msra.mxu0 0.0
    %183 = vmatprep.subr.mxu0 0.0
    %184 = vmatpush2.msra.mxu0 0.0
    %185 = vmatprep.subr.mxu0 0.0
    %186 = vmatpush2.msra.mxu0 0.0
    %187 = vmatprep.subr.mxu0 0.0
    %188 = vmatpush2.msra.mxu0 0.0
    %189 = vmatprep.subr.mxu0 0.0
    %190 = vmatpush2.msra.mxu0 0.0
    %191 = vmatprep.subr.mxu0 0.0
    %192 = vmatpush2.msra.mxu0 0.0
    %193 = vmatprep.subr.mxu0 0.0
    %194 = vmatpush2.msra.mxu0 0.0
    %195 = vmatprep.subr.mxu0 0.0
    %196 = vmatpush2.msra.mxu0 0.0
    %197 = vmatprep.subr.mxu0 0.0
    %198 = vmatpush2.msra.mxu0 0.0
    %199 = vmatprep.subr.mxu0 0.0
    %200 = vmatpush2.msra.mxu0 0.0
    %201 = vmatprep.subr.mxu0 0.0
    %202 = vmatpush2.msra.mxu0 0.0
    %203 = vmatprep.subr.mxu0 0.0
    %204 = vmatpush2.msra.mxu0 0.0
    %205 = vmatprep.subr.mxu0 0.0
    %206 = vmatpush2.msra.mxu0 0.0
    %207 = vmatprep.subr.mxu0 0.0
    %208 = vmatpush2.msra.mxu0 0.0
    %209 = vmatprep.subr.mxu0 0.0
    %210 = vmatpush2.msra.mxu0 0.0
    %211 = vmatprep.subr.mxu0 0.0
    %212 = vmatpush2.msra.mxu0 0.0
    %213 = vmatprep.mubr.f32.mxu0 0.0
    %214 = vmatmul.mubr.f32.gmra.mxu0 %v132
    %v215 = vpop.f32.mrf.mxu0
    %v216 = vadd.f32 0.0, %v215
    %v217 = vpop.f32.mrf.mxu0
    %218 = vdwg.mxu0
    %219 = vst [vmem:[#allocation8] sm:$0xff] %v216
    // Predicated region
    $region26: #{tpu_custom_call.1} parent=1 // pred_check
      _
    $region27: #{tpu_custom_call.1} parent=1 // pred_check_branch
      %221 = sbr.rel (0) target = $region29
    $region28: #{tpu_custom_call.1} parent=1 // pred_region
      %s223 = ssub.s32 128, 128
      %224 = vsyncadd [#allocation4], %s223
      %s226 = sshll.u32 [#allocation8], 4
      %s227 = int_to_ptr.vmem [resolvable:$true] %s226
      %229 = dma.vmem_to_hbm [thread:$0]  %s227, 128, %s3, [#allocation4]
    $region29: #{tpu_custom_call.1} parent=1 // pred_fallthru
      _
    // Predicated region
    $region30: #{tpu_custom_call.1} parent=1 // pred_check
      _
    $region31: #{tpu_custom_call.1} parent=1 // pred_check_branch
      %231 = sbr.rel (0) target = $region33
    $region32: #{tpu_custom_call.1} parent=1 // pred_region
      %232 = dma.done [#allocation4], 128
    $region33: #{tpu_custom_call.1} parent=1 // pred_fallthru
      _
    %233 = vsyncpa [#allocation3], 1
    %234 = vsyncpa [#allocation6], 1
    %235 = vsyncpa [#allocation4], 1

</llo_original>
